<compile_context>
chip_gen: v7x
topology: tpu7x:2x2x1
jax: 0.10.0
libtpu: 0.0.40
codegen_flags: <defaults>
</compile_context>

<pallas_src>
import math

import jax
import jax.numpy as jnp
from jax.experimental import pallas as pl
from jax.experimental.pallas import tpu as pltpu

_LANES = 128            # vreg lane width; last dim of every block
_MAX_BLOCK_ROWS = 512   # (512, 128) f32 block = 256 KiB/buffer; ~1 MiB total double-buffered
_SMALL_THRESHOLD = 1 << 17   # below ~128K elements a standalone kernel is pure launch overhead


def _cdiv(a, b):
    return -(-a // b)


def _sigmoid_kernel(p_ref, w_ref):
    # Elementwise sigmoid on one lane-dense (block_rows, 128) tile.
    # Compute in f32 (v5e EUP/VPU have no bf16 path), cast only at the store.
    x = p_ref[...].astype(jnp.float32)
    w_ref[...] = jax.nn.sigmoid(x).astype(w_ref.dtype)


def _sigmoid_pallas(params):
    """sigmoid(params) for any shape, via a lane-dense tiled Pallas kernel."""
    orig_shape = params.shape
    dtype = params.dtype
    n = int(params.size)

    # Pack into a lane-dense (padded_rows, 128) slab.
    rows = max(1, _cdiv(n, _LANES))
    if rows >= _MAX_BLOCK_ROWS:
        block_rows = _MAX_BLOCK_ROWS
    else:
        block_rows = max(8, _cdiv(rows, 8) * 8)        # sublane-aligned
    padded_rows = _cdiv(rows, block_rows) * block_rows
    padded = padded_rows * _LANES

    flat = params.reshape(-1)
    if padded != n:
        flat = jnp.pad(flat, (0, padded - n))
    x = flat.reshape(padded_rows, _LANES)

    grid = (padded_rows // block_rows,)
    out = pl.pallas_call(
        _sigmoid_kernel,
        out_shape=jax.ShapeDtypeStruct((padded_rows, _LANES), dtype),
        grid=grid,
        in_specs=[pl.BlockSpec((block_rows, _LANES), lambda i: (i, 0))],
        out_specs=pl.BlockSpec((block_rows, _LANES), lambda i: (i, 0)),
        input_output_aliases={0: 0},   # in/out same shape+dtype: reuse the buffer
        compiler_params=pltpu.CompilerParams(
            dimension_semantics=("parallel",)),        # shard rows across TCs on v7x
    )(x)

    return out.reshape(-1)[:n].reshape(orig_shape)


def sigmoid_weights(params, *, force_pallas=False):
    """Dispatch: tiny vectors use plain jnp (kernel launch overhead dominates)."""
    if not force_pallas and params.size < _SMALL_THRESHOLD:
        return jax.nn.sigmoid(params)
    return _sigmoid_pallas(params)


# ----------------------------------------------------------------------------
# Module-level forwards (graph plumbing stays in plain Python/JAX).
# ----------------------------------------------------------------------------

def node_weights_forward(g, node_params, *, force_pallas=False):
    """NodeWeights.forward: g.nodes['ast'].data['weight'] = sigmoid(params)."""
    g["nodes"]["ast"]["data"]["weight"] = sigmoid_weights(
        node_params, force_pallas=force_pallas)
    return g


def edge_weights_forward(g, etype, edge_params, *, force_pallas=False):
    """EdgeWeights.forward: g.edges[etype].data['weight'] = sigmoid(params)."""
    g["edges"][etype]["data"]["weight"] = sigmoid_weights(
        edge_params, force_pallas=force_pallas)
    return g


def hetero_graph_weights_forward(g, node_params, edge_params_dict, *, force_pallas=False):
    """HeteroGraphWeights.forward.

    Note: the 'type' -> '_type' renaming in the PyTorch ModuleDict is only
    parameter bookkeeping; the weight is still attached under edges['type'].
    """
    g = node_weights_forward(g, node_params, force_pallas=force_pallas)
    for etype, eparams in edge_params_dict.items():
        g = edge_weights_forward(g, etype, eparams, force_pallas=force_pallas)
    return g


def wrapper_model_forward(g, node_params, edge_params_dict, model_fn, *, force_pallas=False):
    """WrapperModel.forward: attach weights, run the wrapped GNN, return logits."""
    # TODO(synk): the wrapped GNN `self.model` is external to this module; a
    # user-supplied `model_fn(g) -> g` stands in for it here.
    g = hetero_graph_weights_forward(
        g, node_params, edge_params_dict, force_pallas=force_pallas)
    g = model_fn(g)
    return g["nodes"]["ast"]["data"]["logits"]


def init_weight_params(key, n):
    """nn.init.normal_(params, mean=calculate_gain('relu')*sqrt(2)/(2n), std=1.0), shape (n, 1)."""
    gain = math.sqrt(2.0)  # calculate_gain('relu')
    mean = gain * math.sqrt(2.0) / (n * 2)
    return mean + jax.random.normal(key, (n, 1), dtype=jnp.float32)


if __name__ == "__main__":
    num_nodes = 16
    num_node_feats = 8
    num_edges_dict = {"type": 24, "calls": 10}

    key = jax.random.PRNGKey(0)
    keys = jax.random.split(key, 2 + len(num_edges_dict))
    k_node, k_feat = keys[0], keys[1]
    k_edges = keys[2:]

    node_params = init_weight_params(k_node, num_nodes)
    edge_params = {
        etype: init_weight_params(k, n)
        for (etype, n), k in zip(num_edges_dict.items(), k_edges)
    }

    # Minimal stand-in for the DGL heterograph `g`.
    g = {
        "nodes": {
            "ast": {
                "data": {
                    "feat": jax.random.normal(
                        k_feat, (num_nodes, num_node_feats), dtype=jnp.float32),
                }
            }
        },
        "edges": {etype: {"data": {}} for etype in num_edges_dict},
    }

    # Trivial stand-in GNN: logits = feat * node_weight (the real model is external).
    def model_fn(graph):
        w = graph["nodes"]["ast"]["data"]["weight"]
        feat = graph["nodes"]["ast"]["data"]["feat"]
        graph["nodes"]["ast"]["data"]["logits"] = feat * w
        return graph

    # force_pallas=True so the Pallas kernel is exercised even at these tiny
    # demo shapes (the production dispatch would use jnp.sigmoid here).
    logits = wrapper_model_forward(
        g, node_params, edge_params, model_fn, force_pallas=True)
    logits = jax.block_until_ready(logits)

    # Correctness checks vs plain JAX reference.
    nw = g["nodes"]["ast"]["data"]["weight"]
    assert nw.shape == (num_nodes, 1)
    assert jnp.allclose(nw, jax.nn.sigmoid(node_params), atol=1e-6)
    for etype, eparams in edge_params.items():
        ew = g["edges"][etype]["data"]["weight"]
        assert ew.shape == eparams.shape
        assert jnp.allclose(ew, jax.nn.sigmoid(eparams), atol=1e-6)
    ref_logits = g["nodes"]["ast"]["data"]["feat"] * jax.nn.sigmoid(node_params)
    assert logits.shape == (num_nodes, num_node_feats)
    assert jnp.allclose(logits, ref_logits, atol=1e-6)

    print("KERNEL_OK")
</pallas_src>

<mosaic_0001>
module attributes {stable_mosaic.version = 11 : i64} {
  func.func @_sigmoid_kernel(%arg0: i32, %arg1: memref<8x128xf32, #tpu.memory_space<vmem>>, %arg2: memref<8x128xf32, #tpu.memory_space<vmem>>) attributes {dimension_semantics = [#tpu.dimension_semantics<parallel>], iteration_bounds = array<i64: 1>, scalar_prefetch = 0 : i64, scratch_operands = 0 : i64, tpu.core_type = #tpu.core_type<tc>, window_params = [{transform_indices = @transform_0, window_bounds = array<i64: 8, 128>}, {transform_indices = @transform_1, window_bounds = array<i64: 8, 128>}]} {
    %c0 = arith.constant 0 : index
    %c0_0 = arith.constant 0 : index
    %0 = vector.load %arg1[%c0, %c0_0] : memref<8x128xf32, #tpu.memory_space<vmem>>, vector<8x128xf32>
    %1 = arith.negf %0 : vector<8x128xf32>
    %2 = math.exp %1 : vector<8x128xf32>
    %cst = arith.constant 1.000000e+00 : f32
    %3 = vector.broadcast %cst : f32 to vector<8x128xf32>
    %4 = arith.addf %3, %2 : vector<8x128xf32>
    %5 = arith.divf %3, %4 : vector<8x128xf32>
    %c0_1 = arith.constant 0 : index
    %c0_2 = arith.constant 0 : index
    %6 = vector.load %arg2[%c0_1, %c0_2] : memref<8x128xf32, #tpu.memory_space<vmem>>, vector<8x128xf32>
    tpu.vector_store %arg2[%c0_1, %c0_2], %5 {strides = array<i32>} : memref<8x128xf32, #tpu.memory_space<vmem>>, vector<8x128xf32>,
    return
  }
  func.func @transform_0(%arg0: i32) -> (i32, i32) {
    %c0_i32 = arith.constant 0 : i32
    %c0_i32_0 = arith.constant 0 : i32
    return %arg0, %c0_i32 : i32, i32
  }
  func.func @transform_1(%arg0: i32) -> (i32, i32) {
    %c0_i32 = arith.constant 0 : i32
    %c0_i32_0 = arith.constant 0 : i32
    return %arg0, %c0_i32 : i32, i32
  }
}

</mosaic_0001>

<llo_original>
// kernel: tpu_custom_call.1
$region0: #{tpu_custom_call.1}
  #allocation0 [shape = 'u32[]', space=smem, size = 0x4, offset = 0x4, fixed_abs, tag = 'smem constant byte address 0x4 - core index']
  #allocation1 [shape = 'u32[144,128]{1,0:T(1,128)}', space=vmem, size = 0x12000, scoped, tag = 'internal scratch']
  %s0 = inlined_call_operand.hbm [shape: f32[8,128], index: 0, kind: input, shape index: {}, may-alias: {0,1}]
  %s1 = inlined_call_operand.hbm [shape: f32[8,128], index: 1, kind: output, shape index: {}, may-alias: {0,1}]
  %s2 = sld [smem:[#allocation0]]
  $region18: #{tpu_custom_call.1} parent=0
    _
  %s4 = ssub.s32 1, %s2
  %s5 = scalar_select 0, %s4, %s2
  $region1: #{tpu_custom_call.1} parent=0
    #allocation2 [shape = 'u8[4096]{0}', space=vmem, size = 0x1000, scoped, tag = 'input window, operand 0, single buffered']
    #allocation3 [shape = 's32[1]{0}', space=sflag, size = 0x4, scoped, tag = 'scoped memory for tpu_custom_call.1']
    #allocation4 [shape = 's32[1]{0}', space=sflag, size = 0x4, scoped, tag = 'scoped memory for tpu_custom_call.1']
    #allocation5 [shape = 'u8[4096]{0}', space=vmem, size = 0x1000, scoped, tag = 'output window, operand 0, single buffered']
    %6 = vsyncpa [#allocation3], 0
    %7 = vsyncpa [#allocation4], 0
    // Predicated region
    $region2: #{tpu_custom_call.1} parent=1 // pred_check
      _
    $region3: #{tpu_custom_call.1} parent=1 // pred_check_branch
      %9 = sbr.rel (0) target = $region5
    $region4: #{tpu_custom_call.1} parent=1 // pred_region
      %s11 = ssub.s32 128, 128
      %12 = vsyncadd [#allocation3], %s11
      %s14 = sshll.u32 [#allocation2], 4
      %s15 = int_to_ptr.vmem [resolvable:$true] %s14
      %17 = dma.hbm_to_vmem [thread:$0]  %s0, 128, %s15, [#allocation3]
    $region5: #{tpu_custom_call.1} parent=1 // pred_fallthru
      _
    // Predicated region
    $region6: #{tpu_custom_call.1} parent=1 // pred_check
      _
    $region7: #{tpu_custom_call.1} parent=1 // pred_check_branch
      %19 = sbr.rel (0) target = $region9
    $region8: #{tpu_custom_call.1} parent=1 // pred_region
      %20 = dma.done [#allocation3], 128
    $region9: #{tpu_custom_call.1} parent=1 // pred_fallthru
      _
    %v21 = vld [vmem:[#allocation2] sm:$0xff]
    %v22 = vxor.u32 %v21, 2147483648
    %v23 = vmul.f32 %v22, 1.442695
    %v24 = vpow.pop %v23
    %v25 = vadd.f32 %v24, 1.0
    %v26 = vrcp.pop %v25
    %v27 = vmul.f32 1.0, %v26
    %28 = vst [vmem:[#allocation5] sm:$0xff] %v27
    // Predicated region
    $region10: #{tpu_custom_call.1} parent=1 // pred_check
      _
    $region11: #{tpu_custom_call.1} parent=1 // pred_check_branch
      %30 = sbr.rel (0) target = $region13
    $region12: #{tpu_custom_call.1} parent=1 // pred_region
      %s32 = ssub.s32 128, 128
      %33 = vsyncadd [#allocation4], %s32
      %s35 = sshll.u32 [#allocation5], 4
      %s36 = int_to_ptr.vmem [resolvable:$true] %s35
      %38 = dma.vmem_to_hbm [thread:$0]  %s36, 128, %s1, [#allocation4]
    $region13: #{tpu_custom_call.1} parent=1 // pred_fallthru
      _
    // Predicated region
    $region14: #{tpu_custom_call.1} parent=1 // pred_check
      _
    $region15: #{tpu_custom_call.1} parent=1 // pred_check_branch
      %40 = sbr.rel (0) target = $region17
    $region16: #{tpu_custom_call.1} parent=1 // pred_region
      %41 = dma.done [#allocation4], 128
    $region17: #{tpu_custom_call.1} parent=1 // pred_fallthru
      _
    %42 = vsyncpa [#allocation3], 1
    %43 = vsyncpa [#allocation4], 1

</llo_original>
